<compile_context>
chip_gen: v5e
topology: v5e:2x2
jax: 0.10.0
libtpu: 0.0.40
codegen_flags: <defaults>
</compile_context>

<pallas_src>
import functools

import jax
import jax.numpy as jnp
from jax.experimental import pallas as pl
from jax.experimental.pallas import tpu as pltpu

_LANE = 128          # TPU lane width; layer-3/4 outputs padded to this
_SUBLANE = 16        # bf16 sublane packing -> keep row tiles multiples of 16
_TILE_B_MAX = 4096   # rows per tile; ~7 MiB peak VMEM at this size


def _round_up(x, m):
    return ((x + m - 1) // m) * m


def _cdiv(a, b):
    return -(-a // b)


def _num_tensorcores():
    """Best-effort TensorCores per chip (2 on v7x and megacore v4/v5p, else 1).

    Perf-only hint: falling back to 1 is always correct.
    """
    try:
        kind = jax.devices()[0].device_kind.lower()
    except Exception:
        return 1
    if any(tag in kind for tag in ("v7", "7x", "v4", "v5p")):
        return 2
    return 1


def _qnetwork_kernel(x_ref,
                     w1_ref, b1_ref,
                     w2_ref, b2_ref,
                     w3_ref, b3_ref,
                     w4_ref, b4_ref,
                     o_ref):
    """relu(x@W1+b1) -> relu(@W2+b2) -> relu(@W3+b3) -> @W4+b4.

    bf16 operands into the MXU, f32 accumulation; bias add / ReLU in f32;
    lane-dense bf16 (tile_b, 128) store (padding sliced off in the wrapper).
    """
    x = x_ref[...]  # already bf16 from the wrapper

    h1 = jnp.dot(x, w1_ref[...], preferred_element_type=jnp.float32) + b1_ref[...]
    h1 = jnp.maximum(h1, 0.0).astype(jnp.bfloat16)

    h2 = jnp.dot(h1, w2_ref[...], preferred_element_type=jnp.float32) + b2_ref[...]
    h2 = jnp.maximum(h2, 0.0).astype(jnp.bfloat16)

    h3 = jnp.dot(h2, w3_ref[...], preferred_element_type=jnp.float32) + b3_ref[...]
    h3 = jnp.maximum(h3, 0.0).astype(jnp.bfloat16)   # 128 lanes (64 are zero pad)

    out = jnp.dot(h3, w4_ref[...], preferred_element_type=jnp.float32) + b4_ref[...]
    o_ref[...] = out.astype(o_ref.dtype)


@functools.partial(jax.jit, static_argnames=("action_size", "min_tiles"))
def qnetwork_forward(state, params, *, action_size, min_tiles=1):
    """QNetwork forward in one Pallas kernel.

    state:  (batch, state_size) float (cast to bf16 internally)
    params: dict from init_qnetwork_params (bf16 weights, f32 biases,
            layers 3/4 padded to 128 lanes).
    min_tiles: testing knob to force a multi-tile grid.
    Returns (batch, action_size) float32.
    """
    batch, state_size = state.shape
    out_pad = params["w4"].shape[1]                  # 128-lane padded output

    x = state.astype(jnp.bfloat16)

    # --- balanced tiling -------------------------------------------------
    n_cores = _num_tensorcores()
    n_tiles = max(_cdiv(batch, _TILE_B_MAX), int(min_tiles))
    if n_cores > 1 and batch >= n_cores * _SUBLANE:
        # Even number of tiles so "parallel" shards across both TensorCores.
        n_tiles = _round_up(max(n_tiles, n_cores), n_cores)
    tile_b = _round_up(_cdiv(batch, n_tiles), _SUBLANE)
    padded_batch = tile_b * n_tiles
    if padded_batch != batch:
        x = jnp.pad(x, ((0, padded_batch - batch), (0, 0)))

    args = (x,
            params["w1"], params["b1"],
            params["w2"], params["b2"],
            params["w3"], params["b3"],
            params["w4"], params["b4"])

    # Advisory cost hint for XLA's scheduler.
    flops = 2 * padded_batch * sum(
        int(params[f"w{i}"].shape[0]) * int(params[f"w{i}"].shape[1])
        for i in range(1, 5))
    weight_bytes = sum(int(p.size) * p.dtype.itemsize for p in params.values())
    bytes_accessed = weight_bytes + padded_batch * (state_size + out_pad) * 2
    cost = pl.CostEstimate(flops=flops, transcendentals=0,
                           bytes_accessed=bytes_accessed)

    out_shape = jax.ShapeDtypeStruct((padded_batch, out_pad), jnp.bfloat16)
    cparams_common = dict(vmem_limit_bytes=32 * 1024 * 1024)

    if n_tiles == 1:
        # Small-batch / single-tile fast path: un-blocked call, no grid
        # pipelining machinery at all.
        out = pl.pallas_call(
            _qnetwork_kernel,
            out_shape=out_shape,
            in_specs=[pl.BlockSpec(a.shape) for a in args],
            out_specs=pl.BlockSpec((padded_batch, out_pad)),
            compiler_params=pltpu.CompilerParams(**cparams_common),
            cost_estimate=cost,
        )(*args)
    else:
        const = lambda i: (0, 0)                     # weights/biases pinned in VMEM
        in_specs = [pl.BlockSpec((tile_b, state_size), lambda i: (i, 0))]
        for k in range(1, 5):
            in_specs.append(pl.BlockSpec(params[f"w{k}"].shape, const))
            in_specs.append(pl.BlockSpec(params[f"b{k}"].shape, const))
        out = pl.pallas_call(
            _qnetwork_kernel,
            out_shape=out_shape,
            grid=(n_tiles,),
            in_specs=in_specs,
            out_specs=pl.BlockSpec((tile_b, out_pad), lambda i: (i, 0)),
            compiler_params=pltpu.CompilerParams(
                dimension_semantics=("parallel",), **cparams_common),
            cost_estimate=cost,
        )(*args)

    return out[:batch, :action_size].astype(jnp.float32)


def init_qnetwork_params(key, state_size, action_size):
    """PyTorch nn.Linear-style init (U[-1/sqrt(fan_in), +1/sqrt(fan_in)]).

    Weights stored as (in_features, out_features) bf16; biases (1, out) f32.
    Layer 3's output is zero-padded 64 -> 128 lanes (W3 cols, b3, W4 rows) and
    layer 4's output is zero-padded to 128 lanes, so every matmul/store in the
    kernel is lane-dense.  Padding is all zeros, so sliced results are exact.
    """
    dims = [(state_size, 128), (128, 128), (128, 64), (64, action_size)]
    hid3_pad = _LANE
    out_pad = _round_up(action_size, _LANE)
    params = {}
    for i, (fan_in, fan_out) in enumerate(dims, start=1):
        key, wk, bk = jax.random.split(key, 3)
        bound = 1.0 / float(fan_in) ** 0.5
        w = jax.random.uniform(wk, (fan_in, fan_out), jnp.float32,
                               minval=-bound, maxval=bound)
        b = jax.random.uniform(bk, (1, fan_out), jnp.float32,
                               minval=-bound, maxval=bound)
        if i == 3:
            w = jnp.pad(w, ((0, 0), (0, hid3_pad - fan_out)))
            b = jnp.pad(b, ((0, 0), (0, hid3_pad - fan_out)))
        elif i == 4:
            w = jnp.pad(w, ((0, hid3_pad - fan_in), (0, out_pad - fan_out)))
            b = jnp.pad(b, ((0, 0), (0, out_pad - fan_out)))
        params[f"w{i}"] = w.astype(jnp.bfloat16)
        params[f"b{i}"] = b
    return params


def qnetwork_reference(state, params, action_size):
    """Plain-JAX f32 reference on the same (bf16) weights, for correctness."""
    w1 = params["w1"].astype(jnp.float32)
    w2 = params["w2"].astype(jnp.float32)
    w3 = params["w3"].astype(jnp.float32)
    w4 = params["w4"].astype(jnp.float32)
    h = jnp.maximum(state @ w1 + params["b1"], 0.0)
    h = jnp.maximum(h @ w2 + params["b2"], 0.0)
    h = jnp.maximum(h @ w3 + params["b3"], 0.0)
    out = h @ w4 + params["b4"]
    return out[:, :action_size]


if __name__ == "__main__":
    # Shapes from the Banana navigation task the module was written for.
    STATE_SIZE = 37
    ACTION_SIZE = 4

    key = jax.random.PRNGKey(0)
    key, xk1, xk2, pk = jax.random.split(key, 4)
    params = init_qnetwork_params(pk, STATE_SIZE, ACTION_SIZE)

    # 1) Tiny action-selection batch -> single un-blocked fast path.
    state_small = jax.random.normal(xk1, (2, STATE_SIZE), jnp.float32)
    q_small = qnetwork_forward(state_small, params, action_size=ACTION_SIZE)
    q_small = jax.block_until_ready(q_small)
    ref_small = qnetwork_reference(state_small, params, ACTION_SIZE)
    assert q_small.shape == (2, ACTION_SIZE)
    # bf16 weights/activations/output vs f32 reference -> loosened tolerance.
    assert jnp.allclose(q_small, ref_small, atol=3e-2, rtol=3e-2), \
        "small-batch mismatch vs reference"

    # 2) Replay-minibatch-style batch, forced onto the tiled/parallel grid path.
    state_train = jax.random.normal(xk2, (48, STATE_SIZE), jnp.float32)
    q_train = qnetwork_forward(state_train, params, action_size=ACTION_SIZE,
                               min_tiles=2)
    q_train = jax.block_until_ready(q_train)
    ref_train = qnetwork_reference(state_train, params, ACTION_SIZE)
    assert q_train.shape == (48, ACTION_SIZE)
    assert jnp.allclose(q_train, ref_train, atol=3e-2, rtol=3e-2), \
        "tiled-batch mismatch vs reference"

    print("KERNEL_OK")
</pallas_src>

<mosaic_0001>
module attributes {stable_mosaic.version = 11 : i64} {
  func.func @_qnetwork_kernel(%arg0: memref<16x37xbf16, #tpu.memory_space<vmem>>, %arg1: memref<37x128xbf16, #tpu.memory_space<vmem>>, %arg2: memref<1x128xf32, #tpu.memory_space<vmem>>, %arg3: memref<128x128xbf16, #tpu.memory_space<vmem>>, %arg4: memref<1x128xf32, #tpu.memory_space<vmem>>, %arg5: memref<128x128xbf16, #tpu.memory_space<vmem>>, %arg6: memref<1x128xf32, #tpu.memory_space<vmem>>, %arg7: memref<128x128xbf16, #tpu.memory_space<vmem>>, %arg8: memref<1x128xf32, #tpu.memory_space<vmem>>, %arg9: memref<16x128xbf16, #tpu.memory_space<vmem>>) attributes {dimension_semantics = [], scalar_prefetch = 0 : i64, scratch_operands = 0 : i64, tpu.core_type = #tpu.core_type<tc>} {
    %c0 = arith.constant 0 : index
    %c0_0 = arith.constant 0 : index
    %0 = vector.load %arg0[%c0, %c0_0] : memref<16x37xbf16, #tpu.memory_space<vmem>>, vector<16x37xbf16>
    %c0_1 = arith.constant 0 : index
    %c0_2 = arith.constant 0 : index
    %1 = vector.load %arg1[%c0_1, %c0_2] : memref<37x128xbf16, #tpu.memory_space<vmem>>, vector<37x128xbf16>
    %cst = arith.constant dense<0.000000e+00> : vector<16x128xf32>
    %2 = tpu.matmul %0, %1, %cst {dimension_numbers = #tpu.dot_dimension_numbers<[1], [0], [0], [1], [0, 0, 1, 1], [], []>} : vector<16x37xbf16>, vector<37x128xbf16>, vector<16x128xf32> -> vector<16x128xf32>
    %c0_3 = arith.constant 0 : index
    %c0_4 = arith.constant 0 : index
    %3 = vector.load %arg2[%c0_3, %c0_4] : memref<1x128xf32, #tpu.memory_space<vmem>>, vector<1x128xf32>
    %4 = vector.broadcast %3 : vector<1x128xf32> to vector<16x128xf32>
    %5 = arith.addf %2, %4 : vector<16x128xf32>
    %cst_5 = arith.constant 0.000000e+00 : f32
    %6 = vector.broadcast %cst_5 : f32 to vector<16x128xf32>
    %7 = arith.maximumf %5, %6 : vector<16x128xf32>
    %8 = arith.truncf %7 : vector<16x128xf32> to vector<16x128xbf16>
    %c0_6 = arith.constant 0 : index
    %c0_7 = arith.constant 0 : index
    %9 = vector.load %arg3[%c0_6, %c0_7] : memref<128x128xbf16, #tpu.memory_space<vmem>>, vector<128x128xbf16>
    %cst_8 = arith.constant dense<0.000000e+00> : vector<16x128xf32>
    %10 = tpu.matmul %8, %9, %cst_8 {dimension_numbers = #tpu.dot_dimension_numbers<[1], [0], [0], [1], [0, 0, 1, 1], [], []>} : vector<16x128xbf16>, vector<128x128xbf16>, vector<16x128xf32> -> vector<16x128xf32>
    %c0_9 = arith.constant 0 : index
    %c0_10 = arith.constant 0 : index
    %11 = vector.load %arg4[%c0_9, %c0_10] : memref<1x128xf32, #tpu.memory_space<vmem>>, vector<1x128xf32>
    %12 = vector.broadcast %11 : vector<1x128xf32> to vector<16x128xf32>
    %13 = arith.addf %10, %12 : vector<16x128xf32>
    %cst_11 = arith.constant 0.000000e+00 : f32
    %14 = vector.broadcast %cst_11 : f32 to vector<16x128xf32>
    %15 = arith.maximumf %13, %14 : vector<16x128xf32>
    %16 = arith.truncf %15 : vector<16x128xf32> to vector<16x128xbf16>
    %c0_12 = arith.constant 0 : index
    %c0_13 = arith.constant 0 : index
    %17 = vector.load %arg5[%c0_12, %c0_13] : memref<128x128xbf16, #tpu.memory_space<vmem>>, vector<128x128xbf16>
    %cst_14 = arith.constant dense<0.000000e+00> : vector<16x128xf32>
    %18 = tpu.matmul %16, %17, %cst_14 {dimension_numbers = #tpu.dot_dimension_numbers<[1], [0], [0], [1], [0, 0, 1, 1], [], []>} : vector<16x128xbf16>, vector<128x128xbf16>, vector<16x128xf32> -> vector<16x128xf32>
    %c0_15 = arith.constant 0 : index
    %c0_16 = arith.constant 0 : index
    %19 = vector.load %arg6[%c0_15, %c0_16] : memref<1x128xf32, #tpu.memory_space<vmem>>, vector<1x128xf32>
    %20 = vector.broadcast %19 : vector<1x128xf32> to vector<16x128xf32>
    %21 = arith.addf %18, %20 : vector<16x128xf32>
    %cst_17 = arith.constant 0.000000e+00 : f32
    %22 = vector.broadcast %cst_17 : f32 to vector<16x128xf32>
    %23 = arith.maximumf %21, %22 : vector<16x128xf32>
    %24 = arith.truncf %23 : vector<16x128xf32> to vector<16x128xbf16>
    %c0_18 = arith.constant 0 : index
    %c0_19 = arith.constant 0 : index
    %25 = vector.load %arg7[%c0_18, %c0_19] : memref<128x128xbf16, #tpu.memory_space<vmem>>, vector<128x128xbf16>
    %cst_20 = arith.constant dense<0.000000e+00> : vector<16x128xf32>
    %26 = tpu.matmul %24, %25, %cst_20 {dimension_numbers = #tpu.dot_dimension_numbers<[1], [0], [0], [1], [0, 0, 1, 1], [], []>} : vector<16x128xbf16>, vector<128x128xbf16>, vector<16x128xf32> -> vector<16x128xf32>
    %c0_21 = arith.constant 0 : index
    %c0_22 = arith.constant 0 : index
    %27 = vector.load %arg8[%c0_21, %c0_22] : memref<1x128xf32, #tpu.memory_space<vmem>>, vector<1x128xf32>
    %28 = vector.broadcast %27 : vector<1x128xf32> to vector<16x128xf32>
    %29 = arith.addf %26, %28 : vector<16x128xf32>
    %30 = arith.truncf %29 : vector<16x128xf32> to vector<16x128xbf16>
    %c0_23 = arith.constant 0 : index
    %c0_24 = arith.constant 0 : index
    %31 = vector.load %arg9[%c0_23, %c0_24] : memref<16x128xbf16, #tpu.memory_space<vmem>>, vector<16x128xbf16>
    tpu.vector_store %arg9[%c0_23, %c0_24], %30 {strides = array<i32>} : memref<16x128xbf16, #tpu.memory_space<vmem>>, vector<16x128xbf16>,
    return
  }
}

</mosaic_0001>

<llo_original>
// kernel: qnetwork_forward.1
$region0: #{qnetwork_forward.1}
  #allocation0 [shape = 'u32[]', space=smem, size = 0x4, offset = 0x4, fixed_abs, tag = 'smem constant byte address 0x4 - core index']
  #allocation1 [shape = 'u32[72,128]{1,0:T(1,128)}', space=vmem, size = 0x9000, scoped, tag = 'internal scratch']
  %s0 = inlined_call_operand.vmem [shape: bf16[16,37], index: 0, kind: input, shape index: {}]
  %s1 = inlined_call_operand.hbm [shape: bf16[37,128], index: 1, kind: input, shape index: {}]
  %s2 = inlined_call_operand.vmem [shape: f32[1,128], index: 2, kind: input, shape index: {}]
  %s3 = inlined_call_operand.hbm [shape: bf16[128,128], index: 3, kind: input, shape index: {}]
  %s4 = inlined_call_operand.vmem [shape: f32[1,128], index: 4, kind: input, shape index: {}]
  %s5 = inlined_call_operand.hbm [shape: bf16[128,128], index: 5, kind: input, shape index: {}]
  %s6 = inlined_call_operand.vmem [shape: f32[1,128], index: 6, kind: input, shape index: {}]
  %s7 = inlined_call_operand.hbm [shape: bf16[128,128], index: 7, kind: input, shape index: {}]
  %s8 = inlined_call_operand.vmem [shape: f32[1,128], index: 8, kind: input, shape index: {}]
  %s9 = inlined_call_operand.vmem [shape: bf16[16,128], index: 9, kind: output, shape index: {}]
  %s10 = sld [smem:[#allocation0]]
  $region62: #{qnetwork_forward.1} parent=0
    _
  %s12 = ssub.s32 1, %s10
  %s13 = scalar_select 0, %s12, %s10
  $region1: #{qnetwork_forward.1} parent=0
    #allocation2 [shape = 'u8[10240]{0}', space=vmem, size = 0x2800, scoped, tag = 'input window, operand 1, single buffered']
    #allocation3 [shape = 's32[1]{0}', space=sflag, size = 0x4, scoped, tag = 'scoped memory for qnetwork_forward.1']
    #allocation4 [shape = 'u8[32768]{0}', space=vmem, size = 0x8000, scoped, tag = 'input window, operand 3, single buffered']
    #allocation5 [shape = 's32[1]{0}', space=sflag, size = 0x4, scoped, tag = 'scoped memory for qnetwork_forward.1']
    #allocation6 [shape = 'u8[32768]{0}', space=vmem, size = 0x8000, scoped, tag = 'input window, operand 5, single buffered']
    #allocation7 [shape = 'u8[32768]{0}', space=vmem, size = 0x8000, scoped, tag = 'input window, operand 7, single buffered']
    #allocation8 [shape = 's32[1]{0}', space=sflag, size = 0x4, scoped, tag = 'scoped memory for qnetwork_forward.1']
    %14 = vsyncpa [#allocation3], 0
    %15 = vsyncpa [#allocation5], 0
    %16 = vsyncpa [#allocation8], 0
    // Predicated region
    $region2: #{qnetwork_forward.1} parent=1 // pred_check
      _
    $region3: #{qnetwork_forward.1} parent=1 // pred_check_branch
      %18 = sbr.rel (0) target = $region5
    $region4: #{qnetwork_forward.1} parent=1 // pred_region
      _
    $region5: #{qnetwork_forward.1} parent=1 // pred_fallthru
      _
    // Predicated region
    $region6: #{qnetwork_forward.1} parent=1 // pred_check
      _
    $region7: #{qnetwork_forward.1} parent=1 // pred_check_branch
      %20 = sbr.rel (0) target = $region9
    $region8: #{qnetwork_forward.1} parent=1 // pred_region
      %22 = vsyncadd [#allocation3], 0
      %s23 = sshll.u32 %s1, 4
      %s24 = int_to_ptr.hbm [resolvable:$true] %s23
      %s25 = sshll.u32 [#allocation2], 4
      %s26 = int_to_ptr.vmem [resolvable:$true] %s25
      %31 = dma.hbm_to_vmem [thread:$0]  %s24, 320, %s26, [#allocation3], 64, 64, 4
    $region9: #{qnetwork_forward.1} parent=1 // pred_fallthru
      _
    // Predicated region
    $region10: #{qnetwork_forward.1} parent=1 // pred_check
      _
    $region11: #{qnetwork_forward.1} parent=1 // pred_check_branch
      %33 = sbr.rel (0) target = $region13
    $region12: #{qnetwork_forward.1} parent=1 // pred_region
      _
    $region13: #{qnetwork_forward.1} parent=1 // pred_fallthru
      _
    // Predicated region
    $region14: #{qnetwork_forward.1} parent=1 // pred_check
      _
    $region15: #{qnetwork_forward.1} parent=1 // pred_check_branch
      %35 = sbr.rel (0) target = $region17
    $region16: #{qnetwork_forward.1} parent=1 // pred_region
      %37 = vsyncadd [#allocation5], 0
      %s38 = sshll.u32 %s3, 4
      %s39 = int_to_ptr.hbm [resolvable:$true] %s38
      %s40 = sshll.u32 [#allocation4], 4
      %s41 = int_to_ptr.vmem [resolvable:$true] %s40
      %46 = dma.hbm_to_vmem [thread:$0]  %s39, 1024, %s41, [#allocation5], 64, 64, 4
    $region17: #{qnetwork_forward.1} parent=1 // pred_fallthru
      _
    // Predicated region
    $region18: #{qnetwork_forward.1} parent=1 // pred_check
      _
    $region19: #{qnetwork_forward.1} parent=1 // pred_check_branch
      %48 = sbr.rel (0) target = $region21
    $region20: #{qnetwork_forward.1} parent=1 // pred_region
      _
    $region21: #{qnetwork_forward.1} parent=1 // pred_fallthru
      _
    // Predicated region
    $region22: #{qnetwork_forward.1} parent=1 // pred_check
      _
    $region23: #{qnetwork_forward.1} parent=1 // pred_check_branch
      %50 = sbr.rel (0) target = $region25
    $region24: #{qnetwork_forward.1} parent=1 // pred_region
      %52 = vsyncadd [#allocation5], 0
      %s53 = sshll.u32 %s5, 4
      %s54 = int_to_ptr.hbm [resolvable:$true] %s53
      %s55 = sshll.u32 [#allocation6], 4
      %s56 = int_to_ptr.vmem [resolvable:$true] %s55
      %61 = dma.hbm_to_vmem [thread:$0]  %s54, 1024, %s56, [#allocation5], 64, 64, 4
    $region25: #{qnetwork_forward.1} parent=1 // pred_fallthru
      _
    // Predicated region
    $region26: #{qnetwork_forward.1} parent=1 // pred_check
      _
    $region27: #{qnetwork_forward.1} parent=1 // pred_check_branch
      %63 = sbr.rel (0) target = $region29
    $region28: #{qnetwork_forward.1} parent=1 // pred_region
      _
    $region29: #{qnetwork_forward.1} parent=1 // pred_fallthru
      _
    // Predicated region
    $region30: #{qnetwork_forward.1} parent=1 // pred_check
      _
    $region31: #{qnetwork_forward.1} parent=1 // pred_check_branch
      %65 = sbr.rel (0) target = $region33
    $region32: #{qnetwork_forward.1} parent=1 // pred_region
      %67 = vsyncadd [#allocation8], 0
      %s68 = sshll.u32 %s7, 4
      %s69 = int_to_ptr.hbm [resolvable:$true] %s68
      %s70 = sshll.u32 [#allocation7], 4
      %s71 = int_to_ptr.vmem [resolvable:$true] %s70
      %76 = dma.hbm_to_vmem [thread:$0]  %s69, 1024, %s71, [#allocation8], 64, 64, 4
    $region33: #{qnetwork_forward.1} parent=1 // pred_fallthru
      _
    // Predicated region
    $region34: #{qnetwork_forward.1} parent=1 // pred_check
      _
    $region35: #{qnetwork_forward.1} parent=1 // pred_check_branch
      %78 = sbr.rel (0) target = $region37
    $region36: #{qnetwork_forward.1} parent=1 // pred_region
      _
    $region37: #{qnetwork_forward.1} parent=1 // pred_fallthru
      _
    // Predicated region
    $region38: #{qnetwork_forward.1} parent=1 // pred_check
      _
    $region39: #{qnetwork_forward.1} parent=1 // pred_check_branch
      %80 = sbr.rel (0) target = $region41
    $region40: #{qnetwork_forward.1} parent=1 // pred_region
      %82 = dma.done [#allocation3], 320
    $region41: #{qnetwork_forward.1} parent=1 // pred_fallthru
      _
    // Predicated region
    $region42: #{qnetwork_forward.1} parent=1 // pred_check
      _
    $region43: #{qnetwork_forward.1} parent=1 // pred_check_branch
      %84 = sbr.rel (0) target = $region45
    $region44: #{qnetwork_forward.1} parent=1 // pred_region
      %86 = dma.done [#allocation5], 1024
    $region45: #{qnetwork_forward.1} parent=1 // pred_fallthru
      _
    // Predicated region
    $region46: #{qnetwork_forward.1} parent=1 // pred_check
      _
    $region47: #{qnetwork_forward.1} parent=1 // pred_check_branch
      %88 = sbr.rel (0) target = $region49
    $region48: #{qnetwork_forward.1} parent=1 // pred_region
      %90 = dma.done [#allocation5], 1024
    $region49: #{qnetwork_forward.1} parent=1 // pred_fallthru
      _
    // Predicated region
    $region50: #{qnetwork_forward.1} parent=1 // pred_check
      _
    $region51: #{qnetwork_forward.1} parent=1 // pred_check_branch
      %92 = sbr.rel (0) target = $region53
    $region52: #{qnetwork_forward.1} parent=1 // pred_region
      %94 = dma.done [#allocation8], 1024
    $region53: #{qnetwork_forward.1} parent=1 // pred_fallthru
      _
    %v96 = vld [vmem:[%s0] sm:$0xf]
    %v97 = vld [vmem:[%s0 + $0x4] sm:$0xf]
    %v98 = vld [vmem:[#allocation2] sm:$0xf]
    %v99 = vld [vmem:[#allocation2 + $0x4] sm:$0xf]
    %v100 = vld [vmem:[#allocation2 + $0x8] sm:$0xf]
    %v101 = vld [vmem:[#allocation2 + $0xc] sm:$0xf]
    %v102 = vld [vmem:[#allocation2 + $0x10] sm:$0x7]
    %v103 = vld [vmem:[%s2] sm:$0x1]
    %v105 = vperm.slane %v103, 0
    %v109 = vunpack.c.l.b16 %v96
    %v110 = vunpack.c.l.b16 %v97
    %v111 = vpack.c.b16 %v110, %v109
    %v117 = vunpack.c.l.b16 %v98
    %v118 = vunpack.c.l.b16 %v99
    %v119 = vunpack.c.l.b16 %v100
    %v120 = vunpack.c.l.b16 %v101
    %v121 = vunpack.c.l.b16 %v102
    %v122 = vpack.c.b16 %v118, %v117
    %v123 = vpack.c.b16 %v120, %v119
    %v124 = vpack.c.b16 %v121, %v121
    %vm127 = vcmask 302080
    %v129 = vsel %vm127, %v111, 0
    %vm131 = vcmask 1041408
    %vm132 = vcmask 1042432
    %v133 = vsel %vm131, 4294967295, 65535
    %v134 = vsel %vm132, %v133, 0
    %v136 = vand.u32 %v124, %v134
    %138 = vmatpush.bf16.msra.mxu0 0
    %139 = vmatpush.bf16.msra.mxu0 0
    %140 = vmatpush.bf16.msra.mxu0 0
    %141 = vmatpush.bf16.msra.mxu0 0
    %142 = vmatpush.bf16.msra.mxu0 0
    %143 = vmatpush.bf16.msra.mxu0 %v136
    %144 = vmatpush.bf16.msra.mxu0 %v123
    %145 = vmatpush.bf16.msra.mxu0 %v122
    %146 = vmatmul.bf16.gmra.mxu0 %v129
    %v147 = vpop.f32.mrf.mxu0
    %v148 = vadd.f32 %v105, %v147
    %v149 = vpop.f32.mrf.mxu0
    %v150 = vadd.f32 %v105, %v149
    %151 = vdwg.mxu0
    %v152 = vmax.f32 %v148, 0.0
    %v153 = vmax.f32 %v150, 0.0
    %v154 = vpack.c.bf16 %v153, %v152
    %v155 = vld [vmem:[#allocation4] sm:$0xf]
    %v156 = vld [vmem:[#allocation4 + $0x4] sm:$0xf]
    %v157 = vld [vmem:[#allocation4 + $0x8] sm:$0xf]
    %v158 = vld [vmem:[#allocation4 + $0xc] sm:$0xf]
    %v159 = vld [vmem:[#allocation4 + $0x10] sm:$0xf]
    %v160 = vld [vmem:[#allocation4 + $0x14] sm:$0xf]
    %v161 = vld [vmem:[#allocation4 + $0x18] sm:$0xf]
    %v162 = vld [vmem:[#allocation4 + $0x1c] sm:$0xf]
    %v163 = vld [vmem:[#allocation4 + $0x20] sm:$0xf]
    %v164 = vld [vmem:[#allocation4 + $0x24] sm:$0xf]
    %v165 = vld [vmem:[#allocation4 + $0x28] sm:$0xf]
    %v166 = vld [vmem:[#allocation4 + $0x2c] sm:$0xf]
    %v167 = vld [vmem:[#allocation4 + $0x30] sm:$0xf]
    %v168 = vld [vmem:[#allocation4 + $0x34] sm:$0xf]
    %v169 = vld [vmem:[#allocation4 + $0x38] sm:$0xf]
    %v170 = vld [vmem:[#allocation4 + $0x3c] sm:$0xf]
    %v171 = vld [vmem:[%s4] sm:$0x1]
    %v173 = vperm.slane %v171, 0
    %v191 = vunpack.c.l.b16 %v155
    %v192 = vunpack.c.l.b16 %v156
    %v193 = vunpack.c.l.b16 %v157
    %v194 = vunpack.c.l.b16 %v158
    %v195 = vunpack.c.l.b16 %v159
    %v196 = vunpack.c.l.b16 %v160
    %v197 = vunpack.c.l.b16 %v161
    %v198 = vunpack.c.l.b16 %v162
    %v199 = vunpack.c.l.b16 %v163
    %v200 = vunpack.c.l.b16 %v164
    %v201 = vunpack.c.l.b16 %v165
    %v202 = vunpack.c.l.b16 %v166
    %v203 = vunpack.c.l.b16 %v167
    %v204 = vunpack.c.l.b16 %v168
    %v205 = vunpack.c.l.b16 %v169
    %v206 = vunpack.c.l.b16 %v170
    %v207 = vpack.c.b16 %v192, %v191
    %v208 = vpack.c.b16 %v194, %v193
    %v209 = vpack.c.b16 %v196, %v195
    %v210 = vpack.c.b16 %v198, %v197
    %v211 = vpack.c.b16 %v200, %v199
    %v212 = vpack.c.b16 %v202, %v201
    %v213 = vpack.c.b16 %v204, %v203
    %v214 = vpack.c.b16 %v206, %v205
    %223 = vmatpush.bf16.msra.mxu0 %v214
    %224 = vmatpush.bf16.msra.mxu0 %v213
    %225 = vmatpush.bf16.msra.mxu0 %v212
    %226 = vmatpush.bf16.msra.mxu0 %v211
    %227 = vmatpush.bf16.msra.mxu0 %v210
    %228 = vmatpush.bf16.msra.mxu0 %v209
    %229 = vmatpush.bf16.msra.mxu0 %v208
    %230 = vmatpush.bf16.msra.mxu0 %v207
    %231 = vmatmul.bf16.gmra.mxu0 %v154
    %v232 = vpop.f32.mrf.mxu0
    %v233 = vadd.f32 %v173, %v232
    %v234 = vpop.f32.mrf.mxu0
    %v235 = vadd.f32 %v173, %v234
    %236 = vdwg.mxu0
    %v237 = vmax.f32 %v233, 0.0
    %v238 = vmax.f32 %v235, 0.0
    %v239 = vpack.c.bf16 %v238, %v237
    %v240 = vld [vmem:[#allocation6] sm:$0xf]
    %v241 = vld [vmem:[#allocation6 + $0x4] sm:$0xf]
    %v242 = vld [vmem:[#allocation6 + $0x8] sm:$0xf]
    %v243 = vld [vmem:[#allocation6 + $0xc] sm:$0xf]
    %v244 = vld [vmem:[#allocation6 + $0x10] sm:$0xf]
    %v245 = vld [vmem:[#allocation6 + $0x14] sm:$0xf]
    %v246 = vld [vmem:[#allocation6 + $0x18] sm:$0xf]
    %v247 = vld [vmem:[#allocation6 + $0x1c] sm:$0xf]
    %v248 = vld [vmem:[#allocation6 + $0x20] sm:$0xf]
    %v249 = vld [vmem:[#allocation6 + $0x24] sm:$0xf]
    %v250 = vld [vmem:[#allocation6 + $0x28] sm:$0xf]
    %v251 = vld [vmem:[#allocation6 + $0x2c] sm:$0xf]
    %v252 = vld [vmem:[#allocation6 + $0x30] sm:$0xf]
    %v253 = vld [vmem:[#allocation6 + $0x34] sm:$0xf]
    %v254 = vld [vmem:[#allocation6 + $0x38] sm:$0xf]
    %v255 = vld [vmem:[#allocation6 + $0x3c] sm:$0xf]
    %v256 = vld [vmem:[%s6] sm:$0x1]
    %v258 = vperm.slane %v256, 0
    %v276 = vunpack.c.l.b16 %v240
    %v277 = vunpack.c.l.b16 %v241
    %v278 = vunpack.c.l.b16 %v242
    %v279 = vunpack.c.l.b16 %v243
    %v280 = vunpack.c.l.b16 %v244
    %v281 = vunpack.c.l.b16 %v245
    %v282 = vunpack.c.l.b16 %v246
    %v283 = vunpack.c.l.b16 %v247
    %v284 = vunpack.c.l.b16 %v248
    %v285 = vunpack.c.l.b16 %v249
    %v286 = vunpack.c.l.b16 %v250
    %v287 = vunpack.c.l.b16 %v251
    %v288 = vunpack.c.l.b16 %v252
    %v289 = vunpack.c.l.b16 %v253
    %v290 = vunpack.c.l.b16 %v254
    %v291 = vunpack.c.l.b16 %v255
    %v292 = vpack.c.b16 %v277, %v276
    %v293 = vpack.c.b16 %v279, %v278
    %v294 = vpack.c.b16 %v281, %v280
    %v295 = vpack.c.b16 %v283, %v282
    %v296 = vpack.c.b16 %v285, %v284
    %v297 = vpack.c.b16 %v287, %v286
    %v298 = vpack.c.b16 %v289, %v288
    %v299 = vpack.c.b16 %v291, %v290
    %308 = vmatpush.bf16.msra.mxu0 %v299
    %309 = vmatpush.bf16.msra.mxu0 %v298
    %310 = vmatpush.bf16.msra.mxu0 %v297
    %311 = vmatpush.bf16.msra.mxu0 %v296
    %312 = vmatpush.bf16.msra.mxu0 %v295
    %313 = vmatpush.bf16.msra.mxu0 %v294
    %314 = vmatpush.bf16.msra.mxu0 %v293
    %315 = vmatpush.bf16.msra.mxu0 %v292
    %316 = vmatmul.bf16.gmra.mxu0 %v239
    %v317 = vpop.f32.mrf.mxu0
    %v318 = vadd.f32 %v258, %v317
    %v319 = vpop.f32.mrf.mxu0
    %v320 = vadd.f32 %v258, %v319
    %321 = vdwg.mxu0
    %v322 = vmax.f32 %v318, 0.0
    %v323 = vmax.f32 %v320, 0.0
    %v324 = vpack.c.bf16 %v323, %v322
    %v325 = vld [vmem:[#allocation7] sm:$0xf]
    %v326 = vld [vmem:[#allocation7 + $0x4] sm:$0xf]
    %v327 = vld [vmem:[#allocation7 + $0x8] sm:$0xf]
    %v328 = vld [vmem:[#allocation7 + $0xc] sm:$0xf]
    %v329 = vld [vmem:[#allocation7 + $0x10] sm:$0xf]
    %v330 = vld [vmem:[#allocation7 + $0x14] sm:$0xf]
    %v331 = vld [vmem:[#allocation7 + $0x18] sm:$0xf]
    %v332 = vld [vmem:[#allocation7 + $0x1c] sm:$0xf]
    %v333 = vld [vmem:[#allocation7 + $0x20] sm:$0xf]
    %v334 = vld [vmem:[#allocation7 + $0x24] sm:$0xf]
    %v335 = vld [vmem:[#allocation7 + $0x28] sm:$0xf]
    %v336 = vld [vmem:[#allocation7 + $0x2c] sm:$0xf]
    %v337 = vld [vmem:[#allocation7 + $0x30] sm:$0xf]
    %v338 = vld [vmem:[#allocation7 + $0x34] sm:$0xf]
    %v339 = vld [vmem:[#allocation7 + $0x38] sm:$0xf]
    %v340 = vld [vmem:[#allocation7 + $0x3c] sm:$0xf]
    %v341 = vld [vmem:[%s8] sm:$0x1]
    %v343 = vperm.slane %v341, 0
    %v361 = vunpack.c.l.b16 %v325
    %v362 = vunpack.c.l.b16 %v326
    %v363 = vunpack.c.l.b16 %v327
    %v364 = vunpack.c.l.b16 %v328
    %v365 = vunpack.c.l.b16 %v329
    %v366 = vunpack.c.l.b16 %v330
    %v367 = vunpack.c.l.b16 %v331
    %v368 = vunpack.c.l.b16 %v332
    %v369 = vunpack.c.l.b16 %v333
    %v370 = vunpack.c.l.b16 %v334
    %v371 = vunpack.c.l.b16 %v335
    %v372 = vunpack.c.l.b16 %v336
    %v373 = vunpack.c.l.b16 %v337
    %v374 = vunpack.c.l.b16 %v338
    %v375 = vunpack.c.l.b16 %v339
    %v376 = vunpack.c.l.b16 %v340
    %v377 = vpack.c.b16 %v362, %v361
    %v378 = vpack.c.b16 %v364, %v363
    %v379 = vpack.c.b16 %v366, %v365
    %v380 = vpack.c.b16 %v368, %v367
    %v381 = vpack.c.b16 %v370, %v369
    %v382 = vpack.c.b16 %v372, %v371
    %v383 = vpack.c.b16 %v374, %v373
    %v384 = vpack.c.b16 %v376, %v375
    %393 = vmatpush.bf16.msra.mxu0 %v384
    %394 = vmatpush.bf16.msra.mxu0 %v383
    %395 = vmatpush.bf16.msra.mxu0 %v382
    %396 = vmatpush.bf16.msra.mxu0 %v381
    %397 = vmatpush.bf16.msra.mxu0 %v380
    %398 = vmatpush.bf16.msra.mxu0 %v379
    %399 = vmatpush.bf16.msra.mxu0 %v378
    %400 = vmatpush.bf16.msra.mxu0 %v377
    %401 = vmatmul.bf16.gmra.mxu0 %v324
    %v402 = vpop.f32.mrf.mxu0
    %v403 = vadd.f32 %v343, %v402
    %v404 = vpop.f32.mrf.mxu0
    %v405 = vadd.f32 %v343, %v404
    %406 = vdwg.mxu0
    %v407 = vpack.c.bf16 %v403, %v403
    %v408 = vpack.c.bf16 %v405, %v405
    %409 = vst [vmem:[%s9] sm:$0xf] %v407
    %410 = vst [vmem:[%s9 + $0x4] sm:$0xf] %v408
    // Predicated region
    $region54: #{qnetwork_forward.1} parent=1 // pred_check
      _
    $region55: #{qnetwork_forward.1} parent=1 // pred_check_branch
      %412 = sbr.rel (0) target = $region57
    $region56: #{qnetwork_forward.1} parent=1 // pred_region
      _
    $region57: #{qnetwork_forward.1} parent=1 // pred_fallthru
      _
    // Predicated region
    $region58: #{qnetwork_forward.1} parent=1 // pred_check
      _
    $region59: #{qnetwork_forward.1} parent=1 // pred_check_branch
      %414 = sbr.rel (0) target = $region61
    $region60: #{qnetwork_forward.1} parent=1 // pred_region
      _
    $region61: #{qnetwork_forward.1} parent=1 // pred_fallthru
      _
    %415 = vsyncpa [#allocation3], 1
    %416 = vsyncpa [#allocation5], 1
    %417 = vsyncpa [#allocation8], 1

</llo_original>
